<compile_context>
chip_gen: v6e
topology: v6e:2x2x1
jax: 0.10.0
libtpu: 0.0.40
codegen_flags: <defaults>
</compile_context>

<pallas_src>
import math

import jax
import jax.numpy as jnp
from jax import lax
from jax.experimental import pallas as pl
from jax.experimental.pallas import tpu as pltpu


def _round_up(v, m):
    return ((v + m - 1) // m) * m


def _mlp_kernel(x_ref, w1_ref, b1_ref, w2t_ref, b2t_ref, ot_ref):
    # x tile streamed as f32; cast to bf16 in-kernel for the MXU.
    x = x_ref[...].astype(jnp.bfloat16)                               # (T, F)
    # hidden = relu(x @ W1 + b1), f32 accumulation on the MXU.
    h = jnp.dot(x, w1_ref[...], preferred_element_type=jnp.float32)  # (T, Hp)
    h = jnp.maximum(h + b1_ref[...], 0.0)
    # Transposed output (classes on sublanes, batch on lanes):
    #   out_T = W2^T @ h^T, written as a rhs-transposed dot_general so no
    #   explicit transpose of h is materialized (einsum 'ch,th->ct').
    ot = lax.dot_general(w2t_ref[...], h.astype(jnp.bfloat16),
                         (((1,), (1,)), ((), ())),
                         preferred_element_type=jnp.float32)          # (Cp, T)
    ot_ref[...] = ot + b2t_ref[...]


def nn_forward(x, w1, b1, w2, b2, *, tile_n=4096):
    """x: (N, n_features) f32. Returns (N, n_classes) f32 logits."""
    n, f = x.shape
    h_dim = w1.shape[1]
    c = w2.shape[1]
    hp = _round_up(h_dim, 128)          # lane-dense hidden width
    cp = _round_up(c, 8)                # classes live on sublanes in the output

    # Batch tiling: cap the tile so batches with > 2 tiles-worth of rows split
    # into >= 2 grid steps (both v7x TensorCores get work); Pallas handles the
    # ragged last tile (out-of-bounds rows are masked on writeback).
    two_way = _round_up(pl.cdiv(n, 2), 128)
    tile_n = max(128, min(tile_n, two_way))
    grid = (pl.cdiv(n, tile_n),)

    # Small weights zero-padded once to layout-friendly shapes; they stay
    # VMEM-resident across the whole grid (constant index_map).
    # Padded hidden lanes: x@0 + 0 -> relu(0) = 0 -> hit zero rows of W2^T.
    # Padded class sublanes: zero rows of W2^T + zero bias -> 0 (sliced off).
    w1_p = jnp.zeros((f, hp), jnp.bfloat16).at[:, :h_dim].set(w1.astype(jnp.bfloat16))
    b1_p = jnp.zeros((1, hp), jnp.float32).at[:, :h_dim].set(
        b1.reshape(1, -1).astype(jnp.float32))
    w2t_p = jnp.zeros((cp, hp), jnp.bfloat16).at[:c, :h_dim].set(
        w2.T.astype(jnp.bfloat16))
    b2t_p = jnp.zeros((cp, 1), jnp.float32).at[:c, 0].set(
        b2.reshape(-1).astype(jnp.float32))

    flops = 2 * n * (f * hp + hp * cp)
    bytes_accessed = (x.size * 4                       # streamed f32 x
                      + w1_p.size * 2 + w2t_p.size * 2  # resident bf16 weights
                      + (b1_p.size + b2t_p.size) * 4    # resident f32 biases
                      + cp * n * 4)                     # transposed f32 output

    out_t = pl.pallas_call(
        _mlp_kernel,
        out_shape=jax.ShapeDtypeStruct((cp, n), jnp.float32),
        grid=grid,
        in_specs=[
            pl.BlockSpec((tile_n, f), lambda i: (i, 0)),   # streamed x tiles
            pl.BlockSpec((f, hp), lambda i: (0, 0)),       # resident W1
            pl.BlockSpec((1, hp), lambda i: (0, 0)),       # resident b1
            pl.BlockSpec((cp, hp), lambda i: (0, 0)),      # resident W2^T
            pl.BlockSpec((cp, 1), lambda i: (0, 0)),       # resident b2^T
        ],
        out_specs=pl.BlockSpec((cp, tile_n), lambda i: (0, i)),
        compiler_params=pltpu.CompilerParams(
            dimension_semantics=("parallel",),
            vmem_limit_bytes=32 * 1024 * 1024,
        ),
        cost_estimate=pl.CostEstimate(
            flops=flops, bytes_accessed=bytes_accessed, transcendentals=0),
    )(x, w1_p, b1_p, w2t_p, b2t_p)

    # (Cp, N) -> (N, C); touches only n * n_classes elements.
    return out_t[:c, :].T


def init_params(key, n_features, n_hidden, n_classes):
    """Deterministic init matching nn.Linear's U(-1/sqrt(fan_in), 1/sqrt(fan_in))."""
    k1, k2, k3, k4 = jax.random.split(key, 4)
    lim1 = 1.0 / math.sqrt(n_features)
    lim2 = 1.0 / math.sqrt(n_hidden)
    w1 = jax.random.uniform(k1, (n_features, n_hidden), jnp.float32, -lim1, lim1)
    b1 = jax.random.uniform(k2, (1, n_hidden), jnp.float32, -lim1, lim1)
    w2 = jax.random.uniform(k3, (n_hidden, n_classes), jnp.float32, -lim2, lim2)
    b2 = jax.random.uniform(k4, (1, n_classes), jnp.float32, -lim2, lim2)
    return w1, b1, w2, b2


if __name__ == "__main__":
    key = jax.random.PRNGKey(0)
    kx, kp = jax.random.split(key)

    n_features = 32
    n_hidden_FC = 10     # default n_hidden_FC=[10]
    n_classes = 4

    # x arrives with arbitrary leading shape; forward does x.view(-1, n_features)
    x_raw = jax.random.normal(kx, (2, 4, n_features), jnp.float32)
    x = x_raw.reshape(-1, n_features)          # (8, 32)
    batch = x.shape[0]

    w1, b1, w2, b2 = init_params(kp, n_features, n_hidden_FC, n_classes)

    out = jax.block_until_ready(nn_forward(x, w1, b1, w2, b2))

    # Reference mirroring the kernel's bf16 operand rounding (f32 accumulation).
    x_bf = x.astype(jnp.bfloat16).astype(jnp.float32)
    w1_bf = w1.astype(jnp.bfloat16).astype(jnp.float32)
    h_ref = jnp.maximum(x_bf @ w1_bf + b1, 0.0)
    h_bf = h_ref.astype(jnp.bfloat16).astype(jnp.float32)
    w2_bf = w2.astype(jnp.bfloat16).astype(jnp.float32)
    ref = h_bf @ w2_bf + b2

    assert out.shape == (batch, n_classes), out.shape
    assert jnp.allclose(out, ref, atol=5e-3, rtol=5e-3), float(jnp.max(jnp.abs(out - ref)))

    print("KERNEL_OK")
</pallas_src>

<mosaic_0001>
module attributes {stable_mosaic.version = 11 : i64} {
  func.func @_mlp_kernel(%arg0: i32, %arg1: memref<128x32xf32, #tpu.memory_space<vmem>>, %arg2: memref<32x128xbf16, #tpu.memory_space<vmem>>, %arg3: memref<1x128xf32, #tpu.memory_space<vmem>>, %arg4: memref<8x128xbf16, #tpu.memory_space<vmem>>, %arg5: memref<8x1xf32, #tpu.memory_space<vmem>>, %arg6: memref<8x128xf32, #tpu.memory_space<vmem>>) attributes {dimension_semantics = [#tpu.dimension_semantics<parallel>], iteration_bounds = array<i64: 1>, scalar_prefetch = 0 : i64, scratch_operands = 0 : i64, tpu.core_type = #tpu.core_type<tc>, window_params = [{transform_indices = @transform_0, window_bounds = array<i64: 128, 32>}, {pipeline_mode = #tpu.pipeline_mode<synchronous>, transform_indices = @transform_1, window_bounds = array<i64: 32, 128>}, {pipeline_mode = #tpu.pipeline_mode<synchronous>, transform_indices = @transform_2, window_bounds = array<i64: 1, 128>}, {pipeline_mode = #tpu.pipeline_mode<synchronous>, transform_indices = @transform_3, window_bounds = array<i64: 8, 128>}, {pipeline_mode = #tpu.pipeline_mode<synchronous>, transform_indices = @transform_4, window_bounds = array<i64: 8, 1>}, {transform_indices = @transform_5, window_bounds = array<i64: 8, 128>}]} {
    %c0 = arith.constant 0 : index
    %c0_0 = arith.constant 0 : index
    %0 = vector.load %arg1[%c0, %c0_0] : memref<128x32xf32, #tpu.memory_space<vmem>>, vector<128x32xf32>
    %1 = arith.truncf %0 : vector<128x32xf32> to vector<128x32xbf16>
    %c0_1 = arith.constant 0 : index
    %c0_2 = arith.constant 0 : index
    %2 = vector.load %arg2[%c0_1, %c0_2] : memref<32x128xbf16, #tpu.memory_space<vmem>>, vector<32x128xbf16>
    %cst = arith.constant dense<0.000000e+00> : vector<128x128xf32>
    %3 = tpu.matmul %1, %2, %cst {dimension_numbers = #tpu.dot_dimension_numbers<[1], [0], [0], [1], [0, 0, 1, 1], [], []>} : vector<128x32xbf16>, vector<32x128xbf16>, vector<128x128xf32> -> vector<128x128xf32>
    %c0_3 = arith.constant 0 : index
    %c0_4 = arith.constant 0 : index
    %4 = vector.load %arg3[%c0_3, %c0_4] : memref<1x128xf32, #tpu.memory_space<vmem>>, vector<1x128xf32>
    %5 = vector.broadcast %4 : vector<1x128xf32> to vector<128x128xf32>
    %6 = arith.addf %3, %5 : vector<128x128xf32>
    %cst_5 = arith.constant 0.000000e+00 : f32
    %7 = vector.broadcast %cst_5 : f32 to vector<128x128xf32>
    %8 = arith.maximumf %6, %7 : vector<128x128xf32>
    %c0_6 = arith.constant 0 : index
    %c0_7 = arith.constant 0 : index
    %9 = vector.load %arg4[%c0_6, %c0_7] : memref<8x128xbf16, #tpu.memory_space<vmem>>, vector<8x128xbf16>
    %10 = arith.truncf %8 : vector<128x128xf32> to vector<128x128xbf16>
    %cst_8 = arith.constant dense<0.000000e+00> : vector<8x128xf32>
    %11 = tpu.matmul %9, %10, %cst_8 {dimension_numbers = #tpu.dot_dimension_numbers<[1], [1], [0], [0], [0, 0, 1, 0], [], []>} : vector<8x128xbf16>, vector<128x128xbf16>, vector<8x128xf32> -> vector<8x128xf32>
    %c0_9 = arith.constant 0 : index
    %c0_10 = arith.constant 0 : index
    %12 = vector.load %arg5[%c0_9, %c0_10] : memref<8x1xf32, #tpu.memory_space<vmem>>, vector<8x1xf32>
    %13 = vector.broadcast %12 : vector<8x1xf32> to vector<8x128xf32>
    %14 = arith.addf %11, %13 : vector<8x128xf32>
    %c0_11 = arith.constant 0 : index
    %c0_12 = arith.constant 0 : index
    %15 = vector.load %arg6[%c0_11, %c0_12] : memref<8x128xf32, #tpu.memory_space<vmem>>, vector<8x128xf32>
    tpu.vector_store %arg6[%c0_11, %c0_12], %14 {strides = array<i32>} : memref<8x128xf32, #tpu.memory_space<vmem>>, vector<8x128xf32>,
    return
  }
  func.func @transform_0(%arg0: i32) -> (i32, i32) {
    %c0_i32 = arith.constant 0 : i32
    %c0_i32_0 = arith.constant 0 : i32
    return %arg0, %c0_i32 : i32, i32
  }
  func.func @transform_1(%arg0: i32) -> (i32, i32) {
    %c0_i32 = arith.constant 0 : i32
    %c0_i32_0 = arith.constant 0 : i32
    %c0_i32_1 = arith.constant 0 : i32
    return %c0_i32, %c0_i32_0 : i32, i32
  }
  func.func @transform_2(%arg0: i32) -> (i32, i32) {
    %c0_i32 = arith.constant 0 : i32
    %c0_i32_0 = arith.constant 0 : i32
    %c0_i32_1 = arith.constant 0 : i32
    return %c0_i32, %c0_i32_0 : i32, i32
  }
  func.func @transform_3(%arg0: i32) -> (i32, i32) {
    %c0_i32 = arith.constant 0 : i32
    %c0_i32_0 = arith.constant 0 : i32
    %c0_i32_1 = arith.constant 0 : i32
    return %c0_i32, %c0_i32_0 : i32, i32
  }
  func.func @transform_4(%arg0: i32) -> (i32, i32) {
    %c0_i32 = arith.constant 0 : i32
    %c0_i32_0 = arith.constant 0 : i32
    %c0_i32_1 = arith.constant 0 : i32
    return %c0_i32, %c0_i32_0 : i32, i32
  }
  func.func @transform_5(%arg0: i32) -> (i32, i32) {
    %c0_i32 = arith.constant 0 : i32
    %c0_i32_0 = arith.constant 0 : i32
    return %c0_i32, %arg0 : i32, i32
  }
}

</mosaic_0001>

<llo_original>
// kernel: tpu_custom_call.1
$region0: #{tpu_custom_call.1}
  #allocation0 [shape = 'u32[]', space=smem, size = 0x4, offset = 0x4, fixed_abs, tag = 'smem constant byte address 0x4 - core index']
  #allocation1 [shape = 'u32[144,128]{1,0:T(1,128)}', space=vmem, size = 0x12000, scoped, tag = 'internal scratch']
  %s0 = inlined_call_operand.vmem [shape: f32[8,32], index: 0, kind: input, shape index: {}]
  %s1 = inlined_call_operand.hbm [shape: bf16[32,128], index: 1, kind: input, shape index: {}]
  %s2 = inlined_call_operand.hbm [shape: f32[1,128], index: 2, kind: input, shape index: {}]
  %s3 = inlined_call_operand.vmem [shape: bf16[8,128], index: 3, kind: input, shape index: {}]
  %s4 = inlined_call_operand.vmem [shape: f32[8,1], index: 4, kind: input, shape index: {}]
  %s5 = inlined_call_operand.hbm [shape: f32[8,8], index: 5, kind: output, shape index: {}]
  %s6 = sld [smem:[#allocation0]]
  $region38: #{tpu_custom_call.1} parent=0
    _
  %s8 = ssub.s32 1, %s6
  %s9 = scalar_select 0, %s8, %s6
  $region1: #{tpu_custom_call.1} parent=0
    #allocation2 [shape = 'u8[8192]{0}', space=vmem, size = 0x2000, scoped, tag = 'input window, operand 1, single buffered']
    #allocation3 [shape = 's32[1]{0}', space=sflag, size = 0x4, scoped, tag = 'scoped memory for tpu_custom_call.1']
    #allocation4 [shape = 's32[1]{0}', space=sflag, size = 0x4, scoped, tag = 'scoped memory for tpu_custom_call.1']
    #allocation5 [shape = 'u8[512]{0}', space=vmem, size = 0x400, scoped, tag = 'input window, operand 2, single buffered']
    #allocation6 [shape = 's32[1]{0}', space=sflag, size = 0x4, scoped, tag = 'scoped memory for tpu_custom_call.1']
    #allocation7 [shape = 'u8[4096]{0}', space=vmem, size = 0x1000, scoped, tag = 'output window, operand 0, single buffered']
    %10 = vsyncpa [#allocation3], 0
    %11 = vsyncpa [#allocation6], 0
    %12 = vsyncpa [#allocation4], 0
    // Predicated region
    $region2: #{tpu_custom_call.1} parent=1 // pred_check
      _
    $region3: #{tpu_custom_call.1} parent=1 // pred_check_branch
      %14 = sbr.rel (0) target = $region5
    $region4: #{tpu_custom_call.1} parent=1 // pred_region
      _
    $region5: #{tpu_custom_call.1} parent=1 // pred_fallthru
      _
    // Predicated region
    $region6: #{tpu_custom_call.1} parent=1 // pred_check
      _
    $region7: #{tpu_custom_call.1} parent=1 // pred_check_branch
      %16 = sbr.rel (0) target = $region9
    $region8: #{tpu_custom_call.1} parent=1 // pred_region
      %s18 = ssub.s32 256, 256
      %19 = vsyncadd [#allocation3], %s18
      %s20 = sshll.u32 [#allocation2], 4
      %s21 = int_to_ptr.vmem [resolvable:$true] %s20
      %26 = dma.hbm_to_vmem [thread:$0]  %s1, 256, %s21, [#allocation3], 64, 64, 4
    $region9: #{tpu_custom_call.1} parent=1 // pred_fallthru
      _
    // Predicated region
    $region10: #{tpu_custom_call.1} parent=1 // pred_check
      _
    $region11: #{tpu_custom_call.1} parent=1 // pred_check_branch
      %28 = sbr.rel (0) target = $region13
    $region12: #{tpu_custom_call.1} parent=1 // pred_region
      %s30 = ssub.s32 16, 16
      %31 = vsyncadd [#allocation6], %s30
      %s33 = sshll.u32 [#allocation5], 4
      %s34 = int_to_ptr.vmem [resolvable:$true] %s33
      %36 = dma.hbm_to_vmem [thread:$0]  %s2, 16, %s34, [#allocation6]
    $region13: #{tpu_custom_call.1} parent=1 // pred_fallthru
      _
    // Predicated region
    $region14: #{tpu_custom_call.1} parent=1 // pred_check
      _
    $region15: #{tpu_custom_call.1} parent=1 // pred_check_branch
      %38 = sbr.rel (0) target = $region17
    $region16: #{tpu_custom_call.1} parent=1 // pred_region
      _
    $region17: #{tpu_custom_call.1} parent=1 // pred_fallthru
      _
    // Predicated region
    $region18: #{tpu_custom_call.1} parent=1 // pred_check
      _
    $region19: #{tpu_custom_call.1} parent=1 // pred_check_branch
      %40 = sbr.rel (0) target = $region21
    $region20: #{tpu_custom_call.1} parent=1 // pred_region
      _
    $region21: #{tpu_custom_call.1} parent=1 // pred_fallthru
      _
    // Predicated region
    $region22: #{tpu_custom_call.1} parent=1 // pred_check
      _
    $region23: #{tpu_custom_call.1} parent=1 // pred_check_branch
      %42 = sbr.rel (0) target = $region25
    $region24: #{tpu_custom_call.1} parent=1 // pred_region
      %43 = dma.done [#allocation3], 256
    $region25: #{tpu_custom_call.1} parent=1 // pred_fallthru
      _
    // Predicated region
    $region26: #{tpu_custom_call.1} parent=1 // pred_check
      _
    $region27: #{tpu_custom_call.1} parent=1 // pred_check_branch
      %45 = sbr.rel (0) target = $region29
    $region28: #{tpu_custom_call.1} parent=1 // pred_region
      %46 = dma.done [#allocation6], 16
    $region29: #{tpu_custom_call.1} parent=1 // pred_fallthru
      _
    %v48 = vld [vmem:[%s0] sm:$0xff]
    %v49 = vld [vmem:[%s0 + $0x8] sm:$0xff]
    %v50 = vld [vmem:[%s0 + $0x10] sm:$0xff]
    %v51 = vld [vmem:[%s0 + $0x18] sm:$0xff]
    %v52 = vld [vmem:[%s0 + $0x20] sm:$0xff]
    %v53 = vld [vmem:[%s0 + $0x28] sm:$0xff]
    %v54 = vld [vmem:[%s0 + $0x30] sm:$0xff]
    %v55 = vld [vmem:[%s0 + $0x38] sm:$0xff]
    %v56 = vld [vmem:[%s0 + $0x40] sm:$0xff]
    %v57 = vld [vmem:[%s0 + $0x48] sm:$0xff]
    %v58 = vld [vmem:[%s0 + $0x50] sm:$0xff]
    %v59 = vld [vmem:[%s0 + $0x58] sm:$0xff]
    %v60 = vld [vmem:[%s0 + $0x60] sm:$0xff]
    %v61 = vld [vmem:[%s0 + $0x68] sm:$0xff]
    %v62 = vld [vmem:[%s0 + $0x70] sm:$0xff]
    %v63 = vld [vmem:[%s0 + $0x78] sm:$0xff]
    %v64 = vpack.c.bf16 %v49, %v48
    %v65 = vpack.c.bf16 %v51, %v50
    %v66 = vpack.c.bf16 %v53, %v52
    %v67 = vpack.c.bf16 %v55, %v54
    %v68 = vpack.c.bf16 %v57, %v56
    %v69 = vpack.c.bf16 %v59, %v58
    %v70 = vpack.c.bf16 %v61, %v60
    %v71 = vpack.c.bf16 %v63, %v62
    %v72 = vld [vmem:[#allocation2] sm:$0xf]
    %v73 = vld [vmem:[#allocation2 + $0x4] sm:$0xf]
    %v74 = vld [vmem:[#allocation2 + $0x8] sm:$0xf]
    %v75 = vld [vmem:[#allocation2 + $0xc] sm:$0xf]
    %v76 = vld [vmem:[#allocation5] sm:$0x1]
    %v78 = vlaneseq
    %v79 = vshrl.u32 %v78, 7
    %v80 = vsub.s32 0, %v79
    %v81 = vrot.slane %v76, %v80
    %v87 = vunpack.c.l.b16 %v72
    %v88 = vunpack.c.l.b16 %v73
    %v89 = vunpack.c.l.b16 %v74
    %v90 = vunpack.c.l.b16 %v75
    %v91 = vpack.c.b16 %v88, %v87
    %v92 = vpack.c.b16 %v90, %v89
    %vm95 = vcmask 261120
    %v97 = vsel %vm95, %v64, 0
    %v100 = vsel %vm95, %v65, 0
    %v103 = vsel %vm95, %v66, 0
    %v106 = vsel %vm95, %v67, 0
    %v109 = vsel %vm95, %v68, 0
    %v112 = vsel %vm95, %v69, 0
    %v115 = vsel %vm95, %v70, 0
    %v118 = vsel %vm95, %v71, 0
    %120 = vmatprep.subr.bf16.mxu0 0
    %121 = vmatpush1.bf16.msra.mxu0 0
    %122 = vmatprep.subr.bf16.mxu0 0
    %123 = vmatpush1.bf16.msra.mxu0 0
    %124 = vmatprep.subr.bf16.mxu0 0
    %125 = vmatpush1.bf16.msra.mxu0 0
    %126 = vmatprep.subr.bf16.mxu0 0
    %127 = vmatpush1.bf16.msra.mxu0 0
    %128 = vmatprep.subr.bf16.mxu0 0
    %129 = vmatpush1.bf16.msra.mxu0 0
    %130 = vmatprep.subr.bf16.mxu0 0
    %131 = vmatpush1.bf16.msra.mxu0 0
    %132 = vmatprep.subr.bf16.mxu0 0
    %133 = vmatpush1.bf16.msra.mxu0 %v92
    %134 = vmatprep.subr.bf16.mxu0 0
    %135 = vmatpush1.bf16.msra.mxu0 %v91
    %136 = vmatprep.subr.bf16.mxu0 0
    %137 = vmatpush2.bf16.msra.mxu0 0
    %138 = vmatprep.subr.bf16.mxu0 0
    %139 = vmatpush2.bf16.msra.mxu0 0
    %140 = vmatprep.subr.bf16.mxu0 0
    %141 = vmatpush2.bf16.msra.mxu0 0
    %142 = vmatprep.subr.bf16.mxu0 0
    %143 = vmatpush2.bf16.msra.mxu0 0
    %144 = vmatprep.subr.bf16.mxu0 0
    %145 = vmatpush2.bf16.msra.mxu0 0
    %146 = vmatprep.subr.bf16.mxu0 0
    %147 = vmatpush2.bf16.msra.mxu0 0
    %148 = vmatprep.subr.bf16.mxu0 0
    %149 = vmatpush2.bf16.msra.mxu0 0
    %150 = vmatprep.subr.bf16.mxu0 0
    %151 = vmatpush2.bf16.msra.mxu0 0
    %152 = vmatprep.mubr.bf16.mxu0 0
    %153 = vmatmul.mubr.bf16.gmra.mxu0 %v97
    %v154 = vpop.f32.mrf.mxu0
    %v155 = vadd.f32 %v81, %v154
    %v156 = vpop.f32.mrf.mxu0
    %v157 = vpop.f32.mrf.mxu0
    %v158 = vadd.f32 %v81, %v157
    %v159 = vpop.f32.mrf.mxu0
    %160 = vmatprep.mubr.bf16.mxu0 0
    %161 = vmatmul.mubr.bf16.gmra.mxu0 %v100
    %v162 = vpop.f32.mrf.mxu0
    %v163 = vadd.f32 %v81, %v162
    %v164 = vpop.f32.mrf.mxu0
    %v165 = vpop.f32.mrf.mxu0
    %v166 = vadd.f32 %v81, %v165
    %v167 = vpop.f32.mrf.mxu0
    %168 = vmatprep.mubr.bf16.mxu0 0
    %169 = vmatmul.mubr.bf16.gmra.mxu0 %v103
    %v170 = vpop.f32.mrf.mxu0
    %v171 = vadd.f32 %v81, %v170
    %v172 = vpop.f32.mrf.mxu0
    %v173 = vpop.f32.mrf.mxu0
    %v174 = vadd.f32 %v81, %v173
    %v175 = vpop.f32.mrf.mxu0
    %176 = vmatprep.mubr.bf16.mxu0 0
    %177 = vmatmul.mubr.bf16.gmra.mxu0 %v106
    %v178 = vpop.f32.mrf.mxu0
    %v179 = vadd.f32 %v81, %v178
    %v180 = vpop.f32.mrf.mxu0
    %v181 = vpop.f32.mrf.mxu0
    %v182 = vadd.f32 %v81, %v181
    %v183 = vpop.f32.mrf.mxu0
    %184 = vmatprep.mubr.bf16.mxu0 0
    %185 = vmatmul.mubr.bf16.gmra.mxu0 %v109
    %v186 = vpop.f32.mrf.mxu0
    %v187 = vadd.f32 %v81, %v186
    %v188 = vpop.f32.mrf.mxu0
    %v189 = vpop.f32.mrf.mxu0
    %v190 = vadd.f32 %v81, %v189
    %v191 = vpop.f32.mrf.mxu0
    %192 = vmatprep.mubr.bf16.mxu0 0
    %193 = vmatmul.mubr.bf16.gmra.mxu0 %v112
    %v194 = vpop.f32.mrf.mxu0
    %v195 = vadd.f32 %v81, %v194
    %v196 = vpop.f32.mrf.mxu0
    %v197 = vpop.f32.mrf.mxu0
    %v198 = vadd.f32 %v81, %v197
    %v199 = vpop.f32.mrf.mxu0
    %200 = vmatprep.mubr.bf16.mxu0 0
    %201 = vmatmul.mubr.bf16.gmra.mxu0 %v115
    %v202 = vpop.f32.mrf.mxu0
    %v203 = vadd.f32 %v81, %v202
    %v204 = vpop.f32.mrf.mxu0
    %v205 = vpop.f32.mrf.mxu0
    %v206 = vadd.f32 %v81, %v205
    %v207 = vpop.f32.mrf.mxu0
    %208 = vmatprep.mubr.bf16.mxu0 0
    %209 = vmatmul.mubr.bf16.gmra.mxu0 %v118
    %v210 = vpop.f32.mrf.mxu0
    %v211 = vadd.f32 %v81, %v210
    %v212 = vpop.f32.mrf.mxu0
    %v213 = vpop.f32.mrf.mxu0
    %v214 = vadd.f32 %v81, %v213
    %v215 = vpop.f32.mrf.mxu0
    %216 = vdwg.mxu0
    %v217 = vmax.f32 %v155, 0.0
    %v218 = vmax.f32 %v158, 0.0
    %v219 = vmax.f32 %v163, 0.0
    %v220 = vmax.f32 %v166, 0.0
    %v221 = vmax.f32 %v171, 0.0
    %v222 = vmax.f32 %v174, 0.0
    %v223 = vmax.f32 %v179, 0.0
    %v224 = vmax.f32 %v182, 0.0
    %v225 = vmax.f32 %v187, 0.0
    %v226 = vmax.f32 %v190, 0.0
    %v227 = vmax.f32 %v195, 0.0
    %v228 = vmax.f32 %v198, 0.0
    %v229 = vmax.f32 %v203, 0.0
    %v230 = vmax.f32 %v206, 0.0
    %v231 = vmax.f32 %v211, 0.0
    %v232 = vmax.f32 %v214, 0.0
    %v233 = vld [vmem:[%s3] sm:$0xf]
    %v234 = vpack.c.bf16 %v218, %v217
    %v235 = vpack.c.bf16 %v220, %v219
    %v236 = vpack.c.bf16 %v222, %v221
    %v237 = vpack.c.bf16 %v224, %v223
    %v238 = vpack.c.bf16 %v226, %v225
    %v239 = vpack.c.bf16 %v228, %v227
    %v240 = vpack.c.bf16 %v230, %v229
    %v241 = vpack.c.bf16 %v232, %v231
    %v242 = vld [vmem:[%s4] sm:$0xff]
    %244 = vset.pattern.permute.xlu0 0
    %245 = vperm.xlu0 %244, %v242
    %v246 = vpop.permute.xlu0 %245
    %248 = vmatprep.subr.bf16.mxu0 0
    %249 = vmatpush1.bf16.xpose.msra.mxu0 %v241
    %250 = vmatprep.subr.bf16.mxu0 0
    %251 = vmatpush1.bf16.xpose.msra.mxu0 %v240
    %252 = vmatprep.subr.bf16.mxu0 0
    %253 = vmatpush1.bf16.xpose.msra.mxu0 %v239
    %254 = vmatprep.subr.bf16.mxu0 0
    %255 = vmatpush1.bf16.xpose.msra.mxu0 %v238
    %256 = vmatprep.subr.bf16.mxu0 0
    %257 = vmatpush1.bf16.xpose.msra.mxu0 %v237
    %258 = vmatprep.subr.bf16.mxu0 0
    %259 = vmatpush1.bf16.xpose.msra.mxu0 %v236
    %260 = vmatprep.subr.bf16.mxu0 0
    %261 = vmatpush1.bf16.xpose.msra.mxu0 %v235
    %262 = vmatprep.subr.bf16.mxu0 0
    %263 = vmatpush1.bf16.xpose.msra.mxu0 %v234
    %264 = vmatprep.subr.bf16.mxu0 0
    %265 = vmatpush2.bf16.xpose.msra.mxu0 0
    %266 = vmatprep.subr.bf16.mxu0 0
    %267 = vmatpush2.bf16.xpose.msra.mxu0 0
    %268 = vmatprep.subr.bf16.mxu0 0
    %269 = vmatpush2.bf16.xpose.msra.mxu0 0
    %270 = vmatprep.subr.bf16.mxu0 0
    %271 = vmatpush2.bf16.xpose.msra.mxu0 0
    %272 = vmatprep.subr.bf16.mxu0 0
    %273 = vmatpush2.bf16.xpose.msra.mxu0 0
    %274 = vmatprep.subr.bf16.mxu0 0
    %275 = vmatpush2.bf16.xpose.msra.mxu0 0
    %276 = vmatprep.subr.bf16.mxu0 0
    %277 = vmatpush2.bf16.xpose.msra.mxu0 0
    %278 = vmatprep.subr.bf16.mxu0 0
    %279 = vmatpush2.bf16.xpose.msra.mxu0 0
    %280 = vmatprep.mubr.bf16.mxu0 0
    %281 = vmatmul.mubr.bf16.gmra.mxu0 %v233
    %v282 = vpop.f32.mrf.mxu0
    %v283 = vadd.f32 %v246, %v282
    %v284 = vpop.f32.mrf.mxu0
    %v285 = vpop.f32.mrf.mxu0
    %v286 = vpop.f32.mrf.mxu0
    %287 = vdwg.mxu0
    %288 = vst [vmem:[#allocation7] sm:$0xff] %v283
    // Predicated region
    $region30: #{tpu_custom_call.1} parent=1 // pred_check
      _
    $region31: #{tpu_custom_call.1} parent=1 // pred_check_branch
      %290 = sbr.rel (0) target = $region33
    $region32: #{tpu_custom_call.1} parent=1 // pred_region
      %s292 = ssub.s32 128, 128
      %293 = vsyncadd [#allocation4], %s292
      %s295 = sshll.u32 [#allocation7], 4
      %s296 = int_to_ptr.vmem [resolvable:$true] %s295
      %298 = dma.vmem_to_hbm [thread:$0]  %s296, 128, %s5, [#allocation4]
    $region33: #{tpu_custom_call.1} parent=1 // pred_fallthru
      _
    // Predicated region
    $region34: #{tpu_custom_call.1} parent=1 // pred_check
      _
    $region35: #{tpu_custom_call.1} parent=1 // pred_check_branch
      %300 = sbr.rel (0) target = $region37
    $region36: #{tpu_custom_call.1} parent=1 // pred_region
      %301 = dma.done [#allocation4], 128
    $region37: #{tpu_custom_call.1} parent=1 // pred_fallthru
      _
    %302 = vsyncpa [#allocation3], 1
    %303 = vsyncpa [#allocation6], 1
    %304 = vsyncpa [#allocation4], 1

</llo_original>
